<compile_context>
chip_gen: v6e
topology: v6e:2x2x1
jax: 0.10.0
libtpu: 0.0.40
codegen_flags: <defaults>
</compile_context>

<pallas_src>
import functools
import math

import jax
import jax.numpy as jnp
from jax.experimental import pallas as pl
from jax.experimental.pallas import tpu as pltpu


def _round_up(x, m):
    return (x + m - 1) // m * m


def _pick_tile(b):
    """MXU/vreg-friendly square tile for the (B, B) score matrix."""
    if b <= 128:
        return max(8, _round_up(b, 8))
    if b < 256:
        return 128
    return 256


def _fold(x, tm, tn, lane):
    """Sum a (tm, tn) f32 tile down to (8, lane) using aligned vreg adds only."""
    acc = x[0:8, 0:lane]
    for r in range(tm // 8):
        for c in range(tn // lane):
            if r == 0 and c == 0:
                continue
            acc = acc + x[r * 8:(r + 1) * 8, c * lane:(c + 1) * lane]
    return acc


def _loss_kernel(d1_ref, d2_ref, im_ref, s_ref, out_ref, scores_ref,
                 *, b_valid, b_pad, tm, tn, lane, num_k):
    i = pl.program_id(0)
    j = pl.program_id(1)
    k = pl.program_id(2)

    # The (8, lane) output block is resident across this row-block's whole (j, k)
    # sweep: zero once, accumulate folded partial sums into it, written back once.
    @pl.when((j == 0) & (k == 0))
    def _():
        out_ref[...] = jnp.zeros_like(out_ref)

    def epilogue(scores):
        d1 = d1_ref[...].astype(jnp.float32)   # (tm, 1): diag - margin, broadcast over cols
        d2 = d2_ref[...].astype(jnp.float32)   # (1, tn): diag - margin, broadcast over rows
        hinge = jnp.maximum(scores - d1, 0.0) + jnp.maximum(scores - d2, 0.0)

        # Only tiles whose [row, col) ranges overlap the global diagonal (or the
        # zero-padded edge) need the iota/compare/select mask.
        needs_mask = (i * tm < (j + 1) * tn) & (j * tn < (i + 1) * tm)
        if b_pad > b_valid:
            needs_mask = needs_mask | ((i + 1) * tm > b_valid) | ((j + 1) * tn > b_valid)

        @pl.when(needs_mask)
        def _():
            row_g = i * tm + jax.lax.broadcasted_iota(jnp.int32, (tm, tn), 0)
            col_g = j * tn + jax.lax.broadcasted_iota(jnp.int32, (tm, tn), 1)
            keep = (row_g != col_g) & (row_g < b_valid) & (col_g < b_valid)
            out_ref[...] += _fold(jnp.where(keep, hinge, 0.0), tm, tn, lane)

        @pl.when(jnp.logical_not(needs_mask))
        def _():
            out_ref[...] += _fold(hinge, tm, tn, lane)

    def tile_dot():
        # NT-form matmul on native dtype (no explicit s.T / transpose), f32 accumulate.
        return jax.lax.dot_general(
            im_ref[...], s_ref[...],
            dimension_numbers=(((1,), (1,)), ((), ())),
            preferred_element_type=jnp.float32,
        )

    if num_k == 1:
        epilogue(tile_dot())
    else:
        @pl.when(k == 0)
        def _():
            scores_ref[...] = jnp.zeros_like(scores_ref)

        scores_ref[...] += tile_dot()

        @pl.when(k == num_k - 1)
        def _():
            epilogue(scores_ref[...])


def contrastive_loss(im, s, margin=0.0, *, block_m=None, block_n=None):
    """im: (B, D), s: (B, D)  ->  scalar float32 loss (max_violation=False path)."""
    assert im.ndim == 2 and im.shape == s.shape
    B, D = im.shape

    t_def = _pick_tile(B)
    tm = int(block_m or t_def)
    tn = int(block_n or t_def)
    assert tm % 8 == 0 and tn % 8 == 0, "tile sizes must be multiples of 8"
    lane = 128 if tn % 128 == 0 else tn

    # K (feature) tiling: untiled for small D, 512-wide blocks otherwise so the
    # double-buffered (tile, tk) input blocks stay a few MiB regardless of D.
    if D <= 1024:
        tk, Dp = D, D
    else:
        tk = 512
        Dp = _round_up(D, tk)

    Bp = _round_up(B, math.lcm(tm, tn))
    num_i, num_j, num_k = Bp // tm, Bp // tn, Dp // tk

    # Zero-pad to tile multiples; padded rows/cols are masked in-kernel, padded
    # feature columns are exact zeros (inert in the dot products).
    im_p = jnp.pad(im, ((0, Bp - B), (0, Dp - D)))
    s_p = jnp.pad(s, ((0, Bp - B), (0, Dp - D)))

    # Diagonal of the score matrix (one fused multiply+reduce); fold the margin in
    # here so the kernel epilogue is just two hinge ops.
    # (Diag comes from the VPU while scores come from the MXU; the explicit
    #  diagonal zeroing in-kernel keeps the diagonal itself exact.)
    thr = jnp.sum(im.astype(jnp.float32) * s.astype(jnp.float32), axis=1)
    thr = thr - jnp.float32(margin)
    thr = jnp.pad(thr, (0, Bp - B))
    d1 = thr.reshape(Bp, 1)    # column form (broadcast over columns)
    d2 = thr.reshape(1, Bp)    # row form    (broadcast over rows)

    kernel = functools.partial(
        _loss_kernel, b_valid=B, b_pad=Bp, tm=tm, tn=tn, lane=lane, num_k=num_k)

    scores_scratch = pltpu.VMEM((tm, tn) if num_k > 1 else (8, 128), jnp.float32)

    partial_sums = pl.pallas_call(
        kernel,
        out_shape=jax.ShapeDtypeStruct((num_i * 8, lane), jnp.float32),
        grid=(num_i, num_j, num_k),
        in_specs=[
            pl.BlockSpec((tm, 1), lambda i, j, k: (i, 0)),    # d1' = diag - margin (col)
            pl.BlockSpec((1, tn), lambda i, j, k: (0, j)),    # d2' = diag - margin (row)
            pl.BlockSpec((tm, tk), lambda i, j, k: (i, k)),   # im rows for this tile
            pl.BlockSpec((tn, tk), lambda i, j, k: (j, k)),   # s rows for this tile
        ],
        out_specs=pl.BlockSpec((8, lane), lambda i, j, k: (i, 0)),
        scratch_shapes=[scores_scratch],
        compiler_params=pltpu.CompilerParams(
            # Row-blocks are independent -> "parallel" (uses both TCs on v7x);
            # col/K axes reduce into the resident output block -> "arbitrary".
            dimension_semantics=("parallel", "arbitrary", "arbitrary"),
        ),
    )(d1, d2, im_p, s_p)

    # Final cross-lane/sublane reduction of the per-row-block partial sums.
    return jnp.sum(partial_sums)


def _reference_loss(im, s, margin=0.0):
    scores = jnp.matmul(im, s.T, precision=jax.lax.Precision.HIGHEST)
    diag = jnp.diagonal(scores)
    d1 = diag[:, None]
    d2 = diag[None, :]
    cost_s = jnp.maximum(margin + scores - d1, 0.0)
    cost_im = jnp.maximum(margin + scores - d2, 0.0)
    eye = jnp.eye(scores.shape[0], dtype=bool)
    cost_s = jnp.where(eye, 0.0, cost_s)
    cost_im = jnp.where(eye, 0.0, cost_im)
    return jnp.sum(cost_s) + jnp.sum(cost_im)


if __name__ == "__main__":
    key = jax.random.PRNGKey(0)
    k1, k2, k3, k4 = jax.random.split(key, 4)

    # Small shapes consistent with the module (batch=8, hidden=32).
    B, D = 8, 32
    im = jax.random.normal(k1, (B, D), dtype=jnp.float32)
    s = jax.random.normal(k2, (B, D), dtype=jnp.float32)
    for margin in (0.0, 0.2):
        loss = jax.block_until_ready(contrastive_loss(im, s, margin=margin))
        ref = _reference_loss(im, s, margin=margin)
        assert jnp.allclose(loss, ref, rtol=5e-3, atol=5e-3), (margin, loss, ref)

    # Multi-tile, ragged-batch path (exercises edge masking + gated diag masking).
    B2, D2 = 160, 48
    im2 = jax.random.normal(k3, (B2, D2), dtype=jnp.float32)
    s2 = jax.random.normal(k4, (B2, D2), dtype=jnp.float32)
    loss2 = jax.block_until_ready(contrastive_loss(im2, s2, margin=0.2))
    ref2 = _reference_loss(im2, s2, margin=0.2)
    assert jnp.allclose(loss2, ref2, rtol=5e-3, atol=5e-3), (loss2, ref2)

    print("KERNEL_OK")
</pallas_src>

<mosaic_0001>
module attributes {stable_mosaic.version = 11 : i64} {
  func.func @_loss_kernel(%arg0: i32, %arg1: i32, %arg2: i32, %arg3: memref<8x1xf32, #tpu.memory_space<vmem>>, %arg4: memref<1x8xf32, #tpu.memory_space<vmem>>, %arg5: memref<8x32xf32, #tpu.memory_space<vmem>>, %arg6: memref<8x32xf32, #tpu.memory_space<vmem>>, %arg7: memref<8x8xf32, #tpu.memory_space<vmem>>, %arg8: memref<8x128xf32, #tpu.memory_space<vmem>>) attributes {dimension_semantics = [#tpu.dimension_semantics<parallel>, #tpu.dimension_semantics<arbitrary>, #tpu.dimension_semantics<arbitrary>], iteration_bounds = array<i64: 1, 1, 1>, scalar_prefetch = 0 : i64, scratch_operands = 1 : i64, tpu.core_type = #tpu.core_type<tc>, window_params = [{transform_indices = @transform_0, window_bounds = array<i64: 8, 1>}, {transform_indices = @transform_1, window_bounds = array<i64: 1, 8>}, {transform_indices = @transform_2, window_bounds = array<i64: 8, 32>}, {transform_indices = @transform_3, window_bounds = array<i64: 8, 32>}, {transform_indices = @transform_4, window_bounds = array<i64: 8, 8>}]} {
    %c0_i32 = arith.constant 0 : i32
    %0 = arith.cmpi eq, %arg1, %c0_i32 : i32
    %c0_i32_0 = arith.constant 0 : i32
    %1 = arith.cmpi eq, %arg2, %c0_i32_0 : i32
    %2 = arith.andi %0, %1 : i1
    %3 = arith.extui %2 : i1 to i32
    %c0_i32_1 = arith.constant 0 : i32
    %4 = arith.cmpi ne, %3, %c0_i32_1 : i32
    scf.if %4 {
      %cst_17 = arith.constant 0.000000e+00 : f32
      %33 = vector.broadcast %cst_17 : f32 to vector<8x8xf32>
      %c0_18 = arith.constant 0 : index
      %c0_19 = arith.constant 0 : index
      %34 = vector.load %arg7[%c0_18, %c0_19] : memref<8x8xf32, #tpu.memory_space<vmem>>, vector<8x8xf32>
      tpu.vector_store %arg7[%c0_18, %c0_19], %33 {strides = array<i32>} : memref<8x8xf32, #tpu.memory_space<vmem>>, vector<8x8xf32>,
    } else {
    }
    %c0 = arith.constant 0 : index
    %c0_2 = arith.constant 0 : index
    %5 = vector.load %arg5[%c0, %c0_2] : memref<8x32xf32, #tpu.memory_space<vmem>>, vector<8x32xf32>
    %c0_3 = arith.constant 0 : index
    %c0_4 = arith.constant 0 : index
    %6 = vector.load %arg6[%c0_3, %c0_4] : memref<8x32xf32, #tpu.memory_space<vmem>>, vector<8x32xf32>
    %cst = arith.constant dense<0.000000e+00> : vector<8x8xf32>
    %7 = tpu.matmul %5, %6, %cst {dimension_numbers = #tpu.dot_dimension_numbers<[1], [1], [0], [0], [0, 0, 1, 0], [], []>} : vector<8x32xf32>, vector<8x32xf32>, vector<8x8xf32> -> vector<8x8xf32>
    %c0_5 = arith.constant 0 : index
    %c0_6 = arith.constant 0 : index
    %8 = vector.load %arg3[%c0_5, %c0_6] : memref<8x1xf32, #tpu.memory_space<vmem>>, vector<8x1xf32>
    %c0_7 = arith.constant 0 : index
    %c0_8 = arith.constant 0 : index
    %9 = vector.load %arg4[%c0_7, %c0_8] : memref<1x8xf32, #tpu.memory_space<vmem>>, vector<1x8xf32>
    %10 = vector.broadcast %8 : vector<8x1xf32> to vector<8x8xf32>
    %11 = arith.subf %7, %10 : vector<8x8xf32>
    %cst_9 = arith.constant 0.000000e+00 : f32
    %12 = vector.broadcast %cst_9 : f32 to vector<8x8xf32>
    %13 = arith.maximumf %11, %12 : vector<8x8xf32>
    %14 = vector.broadcast %9 : vector<1x8xf32> to vector<8x8xf32>
    %15 = arith.subf %7, %14 : vector<8x8xf32>
    %cst_10 = arith.constant 0.000000e+00 : f32
    %16 = vector.broadcast %cst_10 : f32 to vector<8x8xf32>
    %17 = arith.maximumf %15, %16 : vector<8x8xf32>
    %18 = arith.addf %13, %17 : vector<8x8xf32>
    %c8_i32 = arith.constant 8 : i32
    %19 = arith.muli %arg0, %c8_i32 : i32
    %c1_i32 = arith.constant 1 : i32
    %20 = arith.addi %arg1, %c1_i32 : i32
    %c8_i32_11 = arith.constant 8 : i32
    %21 = arith.muli %20, %c8_i32_11 : i32
    %22 = arith.cmpi slt, %19, %21 : i32
    %c8_i32_12 = arith.constant 8 : i32
    %23 = arith.muli %arg1, %c8_i32_12 : i32
    %c1_i32_13 = arith.constant 1 : i32
    %24 = arith.addi %arg0, %c1_i32_13 : i32
    %c8_i32_14 = arith.constant 8 : i32
    %25 = arith.muli %24, %c8_i32_14 : i32
    %26 = arith.cmpi slt, %23, %25 : i32
    %27 = arith.andi %22, %26 : i1
    %28 = arith.extui %27 : i1 to i32
    %c0_i32_15 = arith.constant 0 : i32
    %29 = arith.cmpi ne, %28, %c0_i32_15 : i32
    scf.if %29 {
      %c8_i32_17 = arith.constant 8 : i32
      %33 = arith.muli %arg0, %c8_i32_17 : i32
      %34 = tpu.iota {dimensions = array<i32: 0>} : vector<8x8xi32>
      %35 = vector.broadcast %33 : i32 to vector<8x8xi32>
      %36 = arith.addi %35, %34 : vector<8x8xi32>
      %c8_i32_18 = arith.constant 8 : i32
      %37 = arith.muli %arg1, %c8_i32_18 : i32
      %38 = tpu.iota {dimensions = array<i32: 1>} : vector<8x8xi32>
      %39 = vector.broadcast %37 : i32 to vector<8x8xi32>
      %40 = arith.addi %39, %38 : vector<8x8xi32>
      %41 = arith.cmpi ne, %36, %40 : vector<8x8xi32>
      %c8_i32_19 = arith.constant 8 : i32
      %42 = vector.broadcast %c8_i32_19 : i32 to vector<8x8xi32>
      %43 = arith.cmpi slt, %36, %42 : vector<8x8xi32>
      %44 = arith.andi %41, %43 : vector<8x8xi1>
      %c8_i32_20 = arith.constant 8 : i32
      %45 = vector.broadcast %c8_i32_20 : i32 to vector<8x8xi32>
      %46 = arith.cmpi slt, %40, %45 : vector<8x8xi32>
      %47 = arith.andi %44, %46 : vector<8x8xi1>
      %c0_21 = arith.constant 0 : index
      %c0_22 = arith.constant 0 : index
      %48 = vector.load %arg7[%c0_21, %c0_22] : memref<8x8xf32, #tpu.memory_space<vmem>>, vector<8x8xf32>
      %cst_23 = arith.constant 0.000000e+00 : f32
      %49 = vector.broadcast %cst_23 : f32 to vector<8x8xf32>
      %50 = arith.select %47, %18, %49 : vector<8x8xi1>, vector<8x8xf32>
      %51 = arith.addf %48, %50 : vector<8x8xf32>
      %c0_24 = arith.constant 0 : index
      %c0_25 = arith.constant 0 : index
      %52 = vector.load %arg7[%c0_24, %c0_25] : memref<8x8xf32, #tpu.memory_space<vmem>>, vector<8x8xf32>
      tpu.vector_store %arg7[%c0_24, %c0_25], %51 {strides = array<i32>} : memref<8x8xf32, #tpu.memory_space<vmem>>, vector<8x8xf32>,
    } else {
    }
    %true = arith.constant true
    %30 = arith.xori %27, %true : i1
    %31 = arith.extui %30 : i1 to i32
    %c0_i32_16 = arith.constant 0 : i32
    %32 = arith.cmpi ne, %31, %c0_i32_16 : i32
    scf.if %32 {
      %c0_17 = arith.constant 0 : index
      %c0_18 = arith.constant 0 : index
      %33 = vector.load %arg7[%c0_17, %c0_18] : memref<8x8xf32, #tpu.memory_space<vmem>>, vector<8x8xf32>
      %34 = arith.addf %33, %18 : vector<8x8xf32>
      %c0_19 = arith.constant 0 : index
      %c0_20 = arith.constant 0 : index
      %35 = vector.load %arg7[%c0_19, %c0_20] : memref<8x8xf32, #tpu.memory_space<vmem>>, vector<8x8xf32>
      tpu.vector_store %arg7[%c0_19, %c0_20], %34 {strides = array<i32>} : memref<8x8xf32, #tpu.memory_space<vmem>>, vector<8x8xf32>,
    } else {
    }
    return
  }
  func.func @transform_0(%arg0: i32, %arg1: i32, %arg2: i32) -> (i32, i32) {
    %c0_i32 = arith.constant 0 : i32
    %c0_i32_0 = arith.constant 0 : i32
    return %arg0, %c0_i32 : i32, i32
  }
  func.func @transform_1(%arg0: i32, %arg1: i32, %arg2: i32) -> (i32, i32) {
    %c0_i32 = arith.constant 0 : i32
    %c0_i32_0 = arith.constant 0 : i32
    return %c0_i32, %arg1 : i32, i32
  }
  func.func @transform_2(%arg0: i32, %arg1: i32, %arg2: i32) -> (i32, i32) {
    %c0_i32 = arith.constant 0 : i32
    return %arg0, %arg2 : i32, i32
  }
  func.func @transform_3(%arg0: i32, %arg1: i32, %arg2: i32) -> (i32, i32) {
    %c0_i32 = arith.constant 0 : i32
    return %arg1, %arg2 : i32, i32
  }
  func.func @transform_4(%arg0: i32, %arg1: i32, %arg2: i32) -> (i32, i32) {
    %c0_i32 = arith.constant 0 : i32
    %c0_i32_0 = arith.constant 0 : i32
    return %arg0, %c0_i32 : i32, i32
  }
}

</mosaic_0001>

<llo_original>
// kernel: tpu_custom_call.1
$region0: #{tpu_custom_call.1}
  #allocation0 [shape = 'u32[]', space=smem, size = 0x4, offset = 0x4, fixed_abs, tag = 'smem constant byte address 0x4 - core index']
  #allocation1 [shape = 'u32[144,128]{1,0:T(1,128)}', space=vmem, size = 0x12000, scoped, tag = 'internal scratch']
  #allocation2 [shape = 'f32[8,128]{1,0:T(8,128)}', space=vmem, size = 0x1000, scoped, tag = 'scratch operand']
  %s0 = inlined_call_operand.vmem [shape: f32[8,1], index: 0, kind: input, shape index: {}]
  %s1 = inlined_call_operand.vmem [shape: f32[1,8], index: 1, kind: input, shape index: {}]
  %s2 = inlined_call_operand.vmem [shape: f32[8,32], index: 2, kind: input, shape index: {}]
  %s3 = inlined_call_operand.hbm [shape: f32[8,32], index: 3, kind: input, shape index: {}]
  %s4 = inlined_call_operand.hbm [shape: f32[8,8], index: 4, kind: output, shape index: {}]
  %s5 = sld [smem:[#allocation0]]
  $region42: #{tpu_custom_call.1} parent=0
    _
  %s7 = ssub.s32 1, %s5
  %s8 = scalar_select 0, %s7, %s5
  $region1: #{tpu_custom_call.1} parent=0
    #allocation3 [shape = 'u8[4096]{0}', space=vmem, size = 0x1000, scoped, tag = 'input window, operand 3, single buffered']
    #allocation4 [shape = 's32[1]{0}', space=sflag, size = 0x4, scoped, tag = 'scoped memory for tpu_custom_call.1']
    #allocation5 [shape = 's32[1]{0}', space=sflag, size = 0x4, scoped, tag = 'scoped memory for tpu_custom_call.1']
    #allocation6 [shape = 'u8[4096]{0}', space=vmem, size = 0x1000, scoped, tag = 'output window, operand 0, single buffered']
    %9 = vsyncpa [#allocation4], 0
    %10 = vsyncpa [#allocation5], 0
    // Predicated region
    $region2: #{tpu_custom_call.1} parent=1 // pred_check
      _
    $region3: #{tpu_custom_call.1} parent=1 // pred_check_branch
      %12 = sbr.rel (0) target = $region5
    $region4: #{tpu_custom_call.1} parent=1 // pred_region
      _
    $region5: #{tpu_custom_call.1} parent=1 // pred_fallthru
      _
    // Predicated region
    $region6: #{tpu_custom_call.1} parent=1 // pred_check
      _
    $region7: #{tpu_custom_call.1} parent=1 // pred_check_branch
      %14 = sbr.rel (0) target = $region9
    $region8: #{tpu_custom_call.1} parent=1 // pred_region
      _
    $region9: #{tpu_custom_call.1} parent=1 // pred_fallthru
      _
    // Predicated region
    $region10: #{tpu_custom_call.1} parent=1 // pred_check
      _
    $region11: #{tpu_custom_call.1} parent=1 // pred_check_branch
      %16 = sbr.rel (0) target = $region13
    $region12: #{tpu_custom_call.1} parent=1 // pred_region
      _
    $region13: #{tpu_custom_call.1} parent=1 // pred_fallthru
      _
    // Predicated region
    $region14: #{tpu_custom_call.1} parent=1 // pred_check
      _
    $region15: #{tpu_custom_call.1} parent=1 // pred_check_branch
      %18 = sbr.rel (0) target = $region17
    $region16: #{tpu_custom_call.1} parent=1 // pred_region
      %s20 = ssub.s32 128, 128
      %21 = vsyncadd [#allocation4], %s20
      %s23 = sshll.u32 [#allocation3], 4
      %s24 = int_to_ptr.vmem [resolvable:$true] %s23
      %26 = dma.hbm_to_vmem [thread:$0]  %s3, 128, %s24, [#allocation4]
    $region17: #{tpu_custom_call.1} parent=1 // pred_fallthru
      _
    // Predicated region
    $region18: #{tpu_custom_call.1} parent=1 // pred_check
      _
    $region19: #{tpu_custom_call.1} parent=1 // pred_check_branch
      %28 = sbr.rel (0) target = $region21
    $region20: #{tpu_custom_call.1} parent=1 // pred_region
      %29 = dma.done [#allocation4], 128
    $region21: #{tpu_custom_call.1} parent=1 // pred_fallthru
      _
    %p30 = scmp.eq.s32.totalorder 0, 0
    %p31 = scmp.eq.s32.totalorder 0, 0
    %p32 = pnand %p30, %p31
    %p33 = pneg %p32
    // Predicated region
    $region22: #{tpu_custom_call.1} parent=1 // pred_check
      _
    $region23: #{tpu_custom_call.1} parent=1 // pred_check_branch
      %35 = sbr.rel (%p32) target = $region25
    $region24: #{tpu_custom_call.1} parent=1 // pred_region
      %vm36 = vcmask 64512
      %37 = vst.msk [vmem:[#allocation6] sm:$0xff] %vm36, 0.0
    $region25: #{tpu_custom_call.1} parent=1 // pred_fallthru
      _
    %v38 = vld [vmem:[%s2] sm:$0xff]
    %v39 = vld [vmem:[#allocation3] sm:$0xff]
    %vm40 = vcmask 261120
    %v42 = vsel %vm40, %v38, 0
    %v45 = vsel %vm40, %v39, 0
    %47 = vmatprep.subr.mxu0 0.0
    %48 = vmatpush1.xpose.msra.mxu0 0.0
    %49 = vmatprep.subr.mxu0 0.0
    %50 = vmatpush1.xpose.msra.mxu0 0.0
    %51 = vmatprep.subr.mxu0 0.0
    %52 = vmatpush1.xpose.msra.mxu0 0.0
    %53 = vmatprep.subr.mxu0 0.0
    %54 = vmatpush1.xpose.msra.mxu0 0.0
    %55 = vmatprep.subr.mxu0 0.0
    %56 = vmatpush1.xpose.msra.mxu0 0.0
    %57 = vmatprep.subr.mxu0 0.0
    %58 = vmatpush1.xpose.msra.mxu0 0.0
    %59 = vmatprep.subr.mxu0 0.0
    %60 = vmatpush1.xpose.msra.mxu0 0.0
    %61 = vmatprep.subr.mxu0 0.0
    %62 = vmatpush1.xpose.msra.mxu0 0.0
    %63 = vmatprep.subr.mxu0 0.0
    %64 = vmatpush1.xpose.msra.mxu0 0.0
    %65 = vmatprep.subr.mxu0 0.0
    %66 = vmatpush1.xpose.msra.mxu0 0.0
    %67 = vmatprep.subr.mxu0 0.0
    %68 = vmatpush1.xpose.msra.mxu0 0.0
    %69 = vmatprep.subr.mxu0 0.0
    %70 = vmatpush1.xpose.msra.mxu0 0.0
    %71 = vmatprep.subr.mxu0 0.0
    %72 = vmatpush1.xpose.msra.mxu0 0.0
    %73 = vmatprep.subr.mxu0 0.0
    %74 = vmatpush1.xpose.msra.mxu0 0.0
    %75 = vmatprep.subr.mxu0 0.0
    %76 = vmatpush1.xpose.msra.mxu0 0.0
    %77 = vmatprep.subr.mxu0 0.0
    %78 = vmatpush1.xpose.msra.mxu0 %v45
    %79 = vmatprep.subr.mxu0 0.0
    %80 = vmatpush2.xpose.msra.mxu0 0.0
    %81 = vmatprep.subr.mxu0 0.0
    %82 = vmatpush2.xpose.msra.mxu0 0.0
    %83 = vmatprep.subr.mxu0 0.0
    %84 = vmatpush2.xpose.msra.mxu0 0.0
    %85 = vmatprep.subr.mxu0 0.0
    %86 = vmatpush2.xpose.msra.mxu0 0.0
    %87 = vmatprep.subr.mxu0 0.0
    %88 = vmatpush2.xpose.msra.mxu0 0.0
    %89 = vmatprep.subr.mxu0 0.0
    %90 = vmatpush2.xpose.msra.mxu0 0.0
    %91 = vmatprep.subr.mxu0 0.0
    %92 = vmatpush2.xpose.msra.mxu0 0.0
    %93 = vmatprep.subr.mxu0 0.0
    %94 = vmatpush2.xpose.msra.mxu0 0.0
    %95 = vmatprep.subr.mxu0 0.0
    %96 = vmatpush2.xpose.msra.mxu0 0.0
    %97 = vmatprep.subr.mxu0 0.0
    %98 = vmatpush2.xpose.msra.mxu0 0.0
    %99 = vmatprep.subr.mxu0 0.0
    %100 = vmatpush2.xpose.msra.mxu0 0.0
    %101 = vmatprep.subr.mxu0 0.0
    %102 = vmatpush2.xpose.msra.mxu0 0.0
    %103 = vmatprep.subr.mxu0 0.0
    %104 = vmatpush2.xpose.msra.mxu0 0.0
    %105 = vmatprep.subr.mxu0 0.0
    %106 = vmatpush2.xpose.msra.mxu0 0.0
    %107 = vmatprep.subr.mxu0 0.0
    %108 = vmatpush2.xpose.msra.mxu0 0.0
    %109 = vmatprep.subr.mxu0 0.0
    %110 = vmatpush2.xpose.msra.mxu0 0.0
    %111 = vmatprep.mubr.f32.mxu0 0.0
    %112 = vmatmul.mubr.f32.gmra.mxu0 %v42
    %v113 = vpop.f32.mrf.mxu0
    %v114 = vadd.f32 0.0, %v113
    %v115 = vpop.f32.mrf.mxu0
    %116 = vdwg.mxu0
    %v117 = vld [vmem:[%s0] sm:$0xff]
    %v118 = vld [vmem:[%s1] sm:$0x1]
    %120 = vset.pattern.permute.xlu0 0
    %121 = vperm.xlu0 %120, %v117
    %v122 = vpop.permute.xlu0 %121
    %v124 = vsub.f32 %v114, %v122
    %v125 = vmax.f32 %v124, 0.0
    %v127 = vlaneseq
    %v128 = vshrl.u32 %v127, 7
    %v129 = vsub.s32 0, %v128
    %v130 = vrot.slane %v118, %v129
    %v132 = vsub.f32 %v114, %v130
    %v133 = vmax.f32 %v132, 0.0
    %v134 = vadd.f32 %v125, %v133
    %s135 = smul.u32 0, 8
    %s136 = sadd.s32 0, 1
    %s137 = smul.u32 %s136, 8
    %p138 = scmp.lt.s32.totalorder %s135, %s137
    %s139 = smul.u32 0, 8
    %s140 = sadd.s32 0, 1
    %s141 = smul.u32 %s140, 8
    %p142 = scmp.lt.s32.totalorder %s139, %s141
    %p143 = pnand %p138, %p142
    %p144 = pneg %p143
    // Predicated region
    $region26: #{tpu_custom_call.1} parent=1 // pred_check
      _
    $region27: #{tpu_custom_call.1} parent=1 // pred_check_branch
      %146 = sbr.rel (%p143) target = $region29
    $region28: #{tpu_custom_call.1} parent=1 // pred_region
      %v147 = vlaneseq
      %v148 = vshrl.u32 %v147, 7
      %v149 = vstv %s135
      %v150 = vadd.s32 %v149, %v148
      %v151 = vlaneseq
      %v152 = vand.u32 %v151, 127
      %v153 = vstv %s139
      %v154 = vadd.s32 %v153, %v152
      %vm155 = vcmp.ne.s32.totalorder %v150, %v154
      %vm156 = vcmp.lt.s32.totalorder %v150, 8
      %vm157 = vmand %vm155, %vm156
      %vm158 = vcmp.lt.s32.totalorder %v154, 8
      %vm159 = vmand %vm157, %vm158
      %v160 = vld [vmem:[#allocation6] sm:$0xff]
      %v161 = vsel %vm159, %v134, 0.0
      %v162 = vadd.f32 %v160, %v161
      %vm163 = vcmask 64512
      %164 = vst.msk [vmem:[#allocation6] sm:$0xff] %vm163, %v162
    $region29: #{tpu_custom_call.1} parent=1 // pred_fallthru
      _
    %p165 = pneg %p144
    // Predicated region
    $region30: #{tpu_custom_call.1} parent=1 // pred_check
      _
    $region31: #{tpu_custom_call.1} parent=1 // pred_check_branch
      %167 = sbr.rel (%p144) target = $region33
    $region32: #{tpu_custom_call.1} parent=1 // pred_region
      %v168 = vld [vmem:[#allocation6] sm:$0xff]
      %v169 = vadd.f32 %v168, %v134
      %vm170 = vcmask 64512
      %171 = vst.msk [vmem:[#allocation6] sm:$0xff] %vm170, %v169
    $region33: #{tpu_custom_call.1} parent=1 // pred_fallthru
      _
    // Predicated region
    $region34: #{tpu_custom_call.1} parent=1 // pred_check
      _
    $region35: #{tpu_custom_call.1} parent=1 // pred_check_branch
      %173 = sbr.rel (0) target = $region37
    $region36: #{tpu_custom_call.1} parent=1 // pred_region
      %s175 = ssub.s32 128, 128
      %176 = vsyncadd [#allocation5], %s175
      %s178 = sshll.u32 [#allocation6], 4
      %s179 = int_to_ptr.vmem [resolvable:$true] %s178
      %181 = dma.vmem_to_hbm [thread:$0]  %s179, 128, %s4, [#allocation5]
    $region37: #{tpu_custom_call.1} parent=1 // pred_fallthru
      _
    // Predicated region
    $region38: #{tpu_custom_call.1} parent=1 // pred_check
      _
    $region39: #{tpu_custom_call.1} parent=1 // pred_check_branch
      %183 = sbr.rel (0) target = $region41
    $region40: #{tpu_custom_call.1} parent=1 // pred_region
      %184 = dma.done [#allocation5], 128
    $region41: #{tpu_custom_call.1} parent=1 // pred_fallthru
      _
    %185 = vsyncpa [#allocation4], 1
    %186 = vsyncpa [#allocation5], 1

</llo_original>
